<compile_context>
chip_gen: v7x
topology: tpu7x:2x2x1
jax: 0.10.0
libtpu: 0.0.40
codegen_flags: <defaults>
</compile_context>

<pallas_src>
import functools

import jax
import jax.numpy as jnp
from jax import lax
from jax.experimental import pallas as pl
from jax.experimental.pallas import tpu as pltpu


def _round_up(x, m):
    return -(-x // m) * m


# ----------------------------------------------------------------------------
# Fused kernel: conv(s=2)+IN+LReLU -> conv(s=1)+IN+LReLU for one batch image
# ----------------------------------------------------------------------------
def _down_kernel(masks_ref, x_ref, w1_ref, w2_ref, o_ref,
                 slab1_ref, slab2_ref, zf_ref, *,
                 Ho, Wo, Cin, Cmid, Cout, L2p, eps, slope):
    P = Ho * Wo
    inv_p = 1.0 / P
    OFF = Wo + 1                         # start of y1 inside the flat scratch

    maskl = masks_ref[0:1, :]            # (1, P) bf16: 0 where col == 0
    maskr = masks_ref[1:2, :]            # (1, P) bf16: 0 where col == Wo-1

    # ---- Block 1: 3x3 stride-2 conv as ONE (Cmid,9Cin) x (9Cin,P) MXU dot --
    # x_ref: (1, 4, Cin, Lp) bf16 = flattened even/odd row/col phases of the
    # row-padded input, front-padded by one zero so all tap slices start >= 0.
    for ky in range(3):
        for kx in range(3):
            k = ky * 3 + kx
            p = (ky % 2) * 2 + (0 if kx == 1 else 1)       # phase = a*2 + b
            s = 1 + (ky // 2) * Wo + (-1 if kx == 0 else 0)
            tap = x_ref[0, p, :, s:s + P]                  # (Cin, P) bf16
            if kx == 0:
                tap = tap * maskl                          # left-border zeros
            slab1_ref[k * Cin:(k + 1) * Cin, :] = tap
    acc1 = jnp.dot(w1_ref[...], slab1_ref[...],
                   preferred_element_type=jnp.float32)      # (Cmid, P) f32

    # ---- InstanceNorm (biased, two-pass centered variance) + LeakyReLU -----
    m1 = jnp.sum(acc1, axis=1, keepdims=True) * inv_p
    d1 = acc1 - m1
    v1 = jnp.sum(d1 * d1, axis=1, keepdims=True) * inv_p
    y1 = d1 * lax.rsqrt(v1 + eps)
    y1 = jnp.where(y1 >= 0.0, y1, slope * y1)

    # ---- Stash y1 row-padded & flat in VMEM (channel-major, bf16) ----------
    # Layout per channel: [Wo+1 zeros][y1 (P)][>=Wo+1 zeros]; only the thin
    # zero strips are written, the interior is fully overwritten every step.
    zf_ref[:, 0:OFF] = jnp.zeros((Cmid, OFF), zf_ref.dtype)
    zf_ref[:, OFF + P:L2p] = jnp.zeros((Cmid, L2p - OFF - P), zf_ref.dtype)
    zf_ref[:, OFF:OFF + P] = y1.astype(zf_ref.dtype)

    # ---- Block 2: 3x3 stride-1 conv as ONE (Cout,9Cmid) x (9Cmid,P) dot ----
    for ky in range(3):
        for kx in range(3):
            k = ky * 3 + kx
            s = OFF + (ky - 1) * Wo + (kx - 1)
            tap = zf_ref[:, s:s + P]                        # (Cmid, P) bf16
            if kx == 0:
                tap = tap * maskl
            elif kx == 2:
                tap = tap * maskr
            slab2_ref[k * Cmid:(k + 1) * Cmid, :] = tap
    acc2 = jnp.dot(w2_ref[...], slab2_ref[...],
                   preferred_element_type=jnp.float32)      # (Cout, P) f32

    m2 = jnp.sum(acc2, axis=1, keepdims=True) * inv_p
    d2 = acc2 - m2
    v2 = jnp.sum(d2 * d2, axis=1, keepdims=True) * inv_p
    y2 = d2 * lax.rsqrt(v2 + eps)
    y2 = jnp.where(y2 >= 0.0, y2, slope * y2)

    # Lane-dense channel-major output: (Cout, P) with P on lanes, no transpose.
    o_ref[0] = y2.astype(o_ref.dtype)


# ----------------------------------------------------------------------------
# Wrapper: layout prep (row pad + phase split + flatten) and pallas_call
# ----------------------------------------------------------------------------
def _weights_to_mat(w_oihw):
    # (Co, Ci, 3, 3) -> (Co, 9*Ci) with column index (ky*3+kx)*Ci + ci.
    co = w_oihw.shape[0]
    return (jnp.transpose(w_oihw, (0, 2, 3, 1)).reshape(co, -1)
            .astype(jnp.bfloat16))


def down_forward(x_nchw, w1_oihw, w2_oihw):
    """Down(in_channels, out_channels, max_pool=False).forward — NCHW in/out."""
    B, Cin, H, W = x_nchw.shape
    assert H % 2 == 0 and W % 2 == 0, "even spatial dims expected"
    Cmid = w1_oihw.shape[0]
    Cout = w2_oihw.shape[0]
    Ho, Wo = H // 2, W // 2
    P = Ho * Wo

    # Row-pad (1 top / 1 bottom), NO column pad (handled by masks in-kernel),
    # split into the 4 even/odd row/col phases, flatten spatially and add one
    # leading zero so every tap is a contiguous in-bounds lane slice.
    # (Same total bytes as the input — no 9x im2col inflation in HBM.)
    x = x_nchw.astype(jnp.bfloat16)
    xr = jnp.pad(x, ((0, 0), (0, 0), (1, 1), (0, 0)))        # (B, Cin, H+2, W)
    xr = xr.reshape(B, Cin, Ho + 1, 2, Wo, 2)
    xph = jnp.transpose(xr, (0, 3, 5, 1, 2, 4))              # (B, a, b, Cin, i', j')
    xph = xph.reshape(B, 4, Cin, (Ho + 1) * Wo)
    L1 = (Ho + 1) * Wo + 1                                   # +1 front zero
    Lp = max(128, _round_up(L1, 128))
    x_ph = jnp.pad(xph, ((0, 0), (0, 0), (0, 0), (1, Lp - L1)))

    # Column-boundary masks (bf16 {0,1}), shared by both convs.
    col = jnp.arange(P, dtype=jnp.int32) % Wo
    masks = jnp.stack([(col != 0), (col != Wo - 1)], axis=0).astype(jnp.bfloat16)

    w1 = _weights_to_mat(w1_oihw)        # (Cmid, 9*Cin)  bf16
    w2 = _weights_to_mat(w2_oihw)        # (Cout, 9*Cmid) bf16

    # Flat row-padded scratch length for the block-1 activation.
    L2p = max(128, _round_up(P + 2 * Wo + 2, 128))

    kernel = functools.partial(
        _down_kernel, Ho=Ho, Wo=Wo, Cin=Cin, Cmid=Cmid, Cout=Cout,
        L2p=L2p, eps=1e-5, slope=0.01)

    # Per-grid-step VMEM footprint (blocks + scratch + accumulators), v7x-safe
    # cap at 56 MiB.
    blk_bytes = (4 * Cin * Lp * 2 + 2 * P * 2
                 + Cmid * 9 * Cin * 2 + Cout * 9 * Cmid * 2
                 + Cout * P * 4
                 + (9 * Cin + 9 * Cmid) * P * 2 + Cmid * L2p * 2
                 + (Cmid + Cout) * P * 4)
    vmem_limit = int(min(56 * 2**20, max(16 * 2**20, 6 * blk_bytes)))

    cost = pl.CostEstimate(
        flops=2 * B * P * 9 * (Cin * Cmid + Cmid * Cout),
        transcendentals=B * (Cmid + Cout),
        bytes_accessed=(x_ph.size * 2 + w1.size * 2 + w2.size * 2
                        + B * Cout * P * 4),
    )

    out = pl.pallas_call(
        kernel,
        out_shape=jax.ShapeDtypeStruct((B, Cout, P), jnp.float32),
        grid_spec=pltpu.PrefetchScalarGridSpec(
            num_scalar_prefetch=0,
            grid=(B,),
            in_specs=[
                pl.BlockSpec((2, P), lambda b: (0, 0)),
                pl.BlockSpec((1, 4, Cin, Lp), lambda b: (b, 0, 0, 0)),
                pl.BlockSpec((Cmid, 9 * Cin), lambda b: (0, 0)),
                pl.BlockSpec((Cout, 9 * Cmid), lambda b: (0, 0)),
            ],
            out_specs=pl.BlockSpec((1, Cout, P), lambda b: (b, 0, 0)),
            scratch_shapes=[
                pltpu.VMEM((9 * Cin, P), jnp.bfloat16),    # block-1 tap slab
                pltpu.VMEM((9 * Cmid, P), jnp.bfloat16),   # block-2 tap slab
                pltpu.VMEM((Cmid, L2p), jnp.bfloat16),     # flat padded y1
            ],
        ),
        compiler_params=pltpu.CompilerParams(
            dimension_semantics=("parallel",),
            vmem_limit_bytes=vmem_limit),
        cost_estimate=cost,
    )(masks, x_ph, w1, w2)

    return out.reshape(B, Cout, Ho, Wo)          # NCHW, pure reshape


# ----------------------------------------------------------------------------
# Pure-JAX f32 reference (correctness check only)
# ----------------------------------------------------------------------------
def _ref_block(x_nchw, w, stride):
    y = lax.conv_general_dilated(
        x_nchw, w, window_strides=(stride, stride), padding=((1, 1), (1, 1)),
        dimension_numbers=("NCHW", "OIHW", "NCHW"))
    mean = jnp.mean(y, axis=(2, 3), keepdims=True)
    var = jnp.mean(jnp.square(y - mean), axis=(2, 3), keepdims=True)
    y = (y - mean) * lax.rsqrt(var + 1e-5)
    return jnp.where(y >= 0.0, y, 0.01 * y)


def _ref_down(x_nchw, w1, w2):
    return _ref_block(_ref_block(x_nchw, w1, 2), w2, 1)


# ----------------------------------------------------------------------------
if __name__ == "__main__":
    in_channels, out_channels = 4, 8
    B, H, W = 2, 16, 16

    key = jax.random.PRNGKey(0)
    k_x, k_w1, k_w2 = jax.random.split(key, 3)

    x = jax.random.normal(k_x, (B, in_channels, H, W), dtype=jnp.float32)
    w1 = 0.1 * jax.random.normal(k_w1, (out_channels, in_channels, 3, 3), jnp.float32)
    w2 = 0.1 * jax.random.normal(k_w2, (out_channels, out_channels, 3, 3), jnp.float32)

    out = jax.jit(down_forward)(x, w1, w2)
    out = jax.block_until_ready(out)

    assert out.shape == (B, out_channels, H // 2, W // 2), out.shape

    # Kernel uses bf16 MXU operands (f32 accumulation/stats), so compare against
    # the f32 reference with a tolerance covering bf16 quantization of two
    # conv+IN layers; structural/layout bugs would produce O(1) errors.
    ref = _ref_down(x, w1, w2)
    max_err = float(jnp.max(jnp.abs(out - ref)))
    assert max_err < 1e-1, max_err

    print("KERNEL_OK")
</pallas_src>

<mosaic_0001>
module attributes {stable_mosaic.version = 11 : i64} {
  func.func @_down_kernel(%arg0: i32, %arg1: memref<2x64xbf16, #tpu.memory_space<vmem>>, %arg2: memref<1x4x4x128xbf16, #tpu.memory_space<vmem>>, %arg3: memref<8x36xbf16, #tpu.memory_space<vmem>>, %arg4: memref<8x72xbf16, #tpu.memory_space<vmem>>, %arg5: memref<1x8x64xf32, #tpu.memory_space<vmem>>, %arg6: memref<36x64xbf16, #tpu.memory_space<vmem>>, %arg7: memref<72x64xbf16, #tpu.memory_space<vmem>>, %arg8: memref<8x128xbf16, #tpu.memory_space<vmem>>) attributes {dimension_semantics = [#tpu.dimension_semantics<parallel>], iteration_bounds = array<i64: 2>, scalar_prefetch = 0 : i64, scratch_operands = 3 : i64, tpu.core_type = #tpu.core_type<tc>, window_params = [{pipeline_mode = #tpu.pipeline_mode<synchronous>, transform_indices = @transform_0, window_bounds = array<i64: 2, 64>}, {transform_indices = @transform_1, window_bounds = array<i64: 1, 4, 4, 128>}, {pipeline_mode = #tpu.pipeline_mode<synchronous>, transform_indices = @transform_2, window_bounds = array<i64: 8, 36>}, {pipeline_mode = #tpu.pipeline_mode<synchronous>, transform_indices = @transform_3, window_bounds = array<i64: 8, 72>}, {transform_indices = @transform_4, window_bounds = array<i64: 1, 8, 64>}]} {
    %c0 = arith.constant 0 : index
    %c0_0 = arith.constant 0 : index
    %0 = vector.load %arg1[%c0, %c0_0] : memref<2x64xbf16, #tpu.memory_space<vmem>>, vector<1x64xbf16>
    %c1 = arith.constant 1 : index
    %c0_1 = arith.constant 0 : index
    %1 = vector.load %arg1[%c1, %c0_1] : memref<2x64xbf16, #tpu.memory_space<vmem>>, vector<1x64xbf16>
    %c0_2 = arith.constant 0 : index
    %c1_3 = arith.constant 1 : index
    %c0_4 = arith.constant 0 : index
    %c0_5 = arith.constant 0 : index
    %2 = vector.load %arg2[%c0_2, %c1_3, %c0_4, %c0_5] : memref<1x4x4x128xbf16, #tpu.memory_space<vmem>>, vector<1x1x4x64xbf16>
    %3 = vector.shape_cast %2 : vector<1x1x4x64xbf16> to vector<4x64xbf16>
    %4 = vector.broadcast %0 : vector<1x64xbf16> to vector<4x64xbf16>
    %5 = arith.mulf %3, %4 : vector<4x64xbf16>
    %c0_6 = arith.constant 0 : index
    %c0_7 = arith.constant 0 : index
    %6 = vector.load %arg6[%c0_6, %c0_7] : memref<36x64xbf16, #tpu.memory_space<vmem>>, vector<4x64xbf16>
    tpu.vector_store %arg6[%c0_6, %c0_7], %5 {strides = array<i32>} : memref<36x64xbf16, #tpu.memory_space<vmem>>, vector<4x64xbf16>,
    %c0_8 = arith.constant 0 : index
    %c0_9 = arith.constant 0 : index
    %c0_10 = arith.constant 0 : index
    %c1_11 = arith.constant 1 : index
    %7 = vector.load %arg2[%c0_8, %c0_9, %c0_10, %c1_11] : memref<1x4x4x128xbf16, #tpu.memory_space<vmem>>, vector<1x1x4x64xbf16>
    %8 = vector.shape_cast %7 : vector<1x1x4x64xbf16> to vector<4x64xbf16>
    %c4 = arith.constant 4 : index
    %c0_12 = arith.constant 0 : index
    %9 = vector.load %arg6[%c4, %c0_12] : memref<36x64xbf16, #tpu.memory_space<vmem>>, vector<4x64xbf16>
    tpu.vector_store %arg6[%c4, %c0_12], %8 {strides = array<i32>} : memref<36x64xbf16, #tpu.memory_space<vmem>>, vector<4x64xbf16>,
    %c0_13 = arith.constant 0 : index
    %c1_14 = arith.constant 1 : index
    %c0_15 = arith.constant 0 : index
    %c1_16 = arith.constant 1 : index
    %10 = vector.load %arg2[%c0_13, %c1_14, %c0_15, %c1_16] : memref<1x4x4x128xbf16, #tpu.memory_space<vmem>>, vector<1x1x4x64xbf16>
    %11 = vector.shape_cast %10 : vector<1x1x4x64xbf16> to vector<4x64xbf16>
    %c8 = arith.constant 8 : index
    %c0_17 = arith.constant 0 : index
    %12 = vector.load %arg6[%c8, %c0_17] : memref<36x64xbf16, #tpu.memory_space<vmem>>, vector<4x64xbf16>
    tpu.vector_store %arg6[%c8, %c0_17], %11 {strides = array<i32>} : memref<36x64xbf16, #tpu.memory_space<vmem>>, vector<4x64xbf16>,
    %c0_18 = arith.constant 0 : index
    %c3 = arith.constant 3 : index
    %c0_19 = arith.constant 0 : index
    %c0_20 = arith.constant 0 : index
    %13 = vector.load %arg2[%c0_18, %c3, %c0_19, %c0_20] : memref<1x4x4x128xbf16, #tpu.memory_space<vmem>>, vector<1x1x4x64xbf16>
    %14 = vector.shape_cast %13 : vector<1x1x4x64xbf16> to vector<4x64xbf16>
    %15 = vector.broadcast %0 : vector<1x64xbf16> to vector<4x64xbf16>
    %16 = arith.mulf %14, %15 : vector<4x64xbf16>
    %c12 = arith.constant 12 : index
    %c0_21 = arith.constant 0 : index
    %17 = vector.load %arg6[%c12, %c0_21] : memref<36x64xbf16, #tpu.memory_space<vmem>>, vector<4x64xbf16>
    tpu.vector_store %arg6[%c12, %c0_21], %16 {strides = array<i32>} : memref<36x64xbf16, #tpu.memory_space<vmem>>, vector<4x64xbf16>,
    %c0_22 = arith.constant 0 : index
    %c2 = arith.constant 2 : index
    %c0_23 = arith.constant 0 : index
    %c1_24 = arith.constant 1 : index
    %18 = vector.load %arg2[%c0_22, %c2, %c0_23, %c1_24] : memref<1x4x4x128xbf16, #tpu.memory_space<vmem>>, vector<1x1x4x64xbf16>
    %19 = vector.shape_cast %18 : vector<1x1x4x64xbf16> to vector<4x64xbf16>
    %c16 = arith.constant 16 : index
    %c0_25 = arith.constant 0 : index
    %20 = vector.load %arg6[%c16, %c0_25] : memref<36x64xbf16, #tpu.memory_space<vmem>>, vector<4x64xbf16>
    tpu.vector_store %arg6[%c16, %c0_25], %19 {strides = array<i32>} : memref<36x64xbf16, #tpu.memory_space<vmem>>, vector<4x64xbf16>,
    %c0_26 = arith.constant 0 : index
    %c3_27 = arith.constant 3 : index
    %c0_28 = arith.constant 0 : index
    %c1_29 = arith.constant 1 : index
    %21 = vector.load %arg2[%c0_26, %c3_27, %c0_28, %c1_29] : memref<1x4x4x128xbf16, #tpu.memory_space<vmem>>, vector<1x1x4x64xbf16>
    %22 = vector.shape_cast %21 : vector<1x1x4x64xbf16> to vector<4x64xbf16>
    %c20 = arith.constant 20 : index
    %c0_30 = arith.constant 0 : index
    %23 = vector.load %arg6[%c20, %c0_30] : memref<36x64xbf16, #tpu.memory_space<vmem>>, vector<4x64xbf16>
    tpu.vector_store %arg6[%c20, %c0_30], %22 {strides = array<i32>} : memref<36x64xbf16, #tpu.memory_space<vmem>>, vector<4x64xbf16>,
    %c0_31 = arith.constant 0 : index
    %c1_32 = arith.constant 1 : index
    %c0_33 = arith.constant 0 : index
    %c8_34 = arith.constant 8 : index
    %24 = vector.load %arg2[%c0_31, %c1_32, %c0_33, %c8_34] : memref<1x4x4x128xbf16, #tpu.memory_space<vmem>>, vector<1x1x4x64xbf16>
    %25 = vector.shape_cast %24 : vector<1x1x4x64xbf16> to vector<4x64xbf16>
    %26 = vector.broadcast %0 : vector<1x64xbf16> to vector<4x64xbf16>
    %27 = arith.mulf %25, %26 : vector<4x64xbf16>
    %c24 = arith.constant 24 : index
    %c0_35 = arith.constant 0 : index
    %28 = vector.load %arg6[%c24, %c0_35] : memref<36x64xbf16, #tpu.memory_space<vmem>>, vector<4x64xbf16>
    tpu.vector_store %arg6[%c24, %c0_35], %27 {strides = array<i32>} : memref<36x64xbf16, #tpu.memory_space<vmem>>, vector<4x64xbf16>,
    %c0_36 = arith.constant 0 : index
    %c0_37 = arith.constant 0 : index
    %c0_38 = arith.constant 0 : index
    %c9 = arith.constant 9 : index
    %29 = vector.load %arg2[%c0_36, %c0_37, %c0_38, %c9] : memref<1x4x4x128xbf16, #tpu.memory_space<vmem>>, vector<1x1x4x64xbf16>
    %30 = vector.shape_cast %29 : vector<1x1x4x64xbf16> to vector<4x64xbf16>
    %c28 = arith.constant 28 : index
    %c0_39 = arith.constant 0 : index
    %31 = vector.load %arg6[%c28, %c0_39] : memref<36x64xbf16, #tpu.memory_space<vmem>>, vector<4x64xbf16>
    tpu.vector_store %arg6[%c28, %c0_39], %30 {strides = array<i32>} : memref<36x64xbf16, #tpu.memory_space<vmem>>, vector<4x64xbf16>,
    %c0_40 = arith.constant 0 : index
    %c1_41 = arith.constant 1 : index
    %c0_42 = arith.constant 0 : index
    %c9_43 = arith.constant 9 : index
    %32 = vector.load %arg2[%c0_40, %c1_41, %c0_42, %c9_43] : memref<1x4x4x128xbf16, #tpu.memory_space<vmem>>, vector<1x1x4x64xbf16>
    %33 = vector.shape_cast %32 : vector<1x1x4x64xbf16> to vector<4x64xbf16>
    %c32 = arith.constant 32 : index
    %c0_44 = arith.constant 0 : index
    %34 = vector.load %arg6[%c32, %c0_44] : memref<36x64xbf16, #tpu.memory_space<vmem>>, vector<4x64xbf16>
    tpu.vector_store %arg6[%c32, %c0_44], %33 {strides = array<i32>} : memref<36x64xbf16, #tpu.memory_space<vmem>>, vector<4x64xbf16>,
    %c0_45 = arith.constant 0 : index
    %c0_46 = arith.constant 0 : index
    %35 = vector.load %arg3[%c0_45, %c0_46] : memref<8x36xbf16, #tpu.memory_space<vmem>>, vector<8x36xbf16>
    %c0_47 = arith.constant 0 : index
    %c0_48 = arith.constant 0 : index
    %36 = vector.load %arg6[%c0_47, %c0_48] : memref<36x64xbf16, #tpu.memory_space<vmem>>, vector<36x64xbf16>
    %cst = arith.constant dense<0.000000e+00> : vector<8x64xf32>
    %37 = tpu.matmul %35, %36, %cst {dimension_numbers = #tpu.dot_dimension_numbers<[1], [0], [0], [1], [0, 0, 1, 1], [], []>} : vector<8x36xbf16>, vector<36x64xbf16>, vector<8x64xf32> -> vector<8x64xf32>
    %cst_49 = arith.constant dense<0.000000e+00> : vector<8xf32>
    %38 = vector.multi_reduction <add>, %37, %cst_49 [1] : vector<8x64xf32> to vector<8xf32>
    %39 = vector.shape_cast %38 : vector<8xf32> to vector<8x1xf32>
    %cst_50 = arith.constant 1.562500e-02 : f32
    %40 = vector.broadcast %cst_50 : f32 to vector<8x1xf32>
    %41 = arith.mulf %39, %40 : vector<8x1xf32>
    %42 = vector.broadcast %41 : vector<8x1xf32> to vector<8x64xf32>
    %43 = arith.subf %37, %42 : vector<8x64xf32>
    %44 = arith.mulf %43, %43 : vector<8x64xf32>
    %cst_51 = arith.constant dense<0.000000e+00> : vector<8xf32>
    %45 = vector.multi_reduction <add>, %44, %cst_51 [1] : vector<8x64xf32> to vector<8xf32>
    %46 = vector.shape_cast %45 : vector<8xf32> to vector<8x1xf32>
    %cst_52 = arith.constant 1.562500e-02 : f32
    %47 = vector.broadcast %cst_52 : f32 to vector<8x1xf32>
    %48 = arith.mulf %46, %47 : vector<8x1xf32>
    %cst_53 = arith.constant 9.99999974E-6 : f32
    %49 = vector.broadcast %cst_53 : f32 to vector<8x1xf32>
    %50 = arith.addf %48, %49 : vector<8x1xf32>
    %51 = math.rsqrt %50 : vector<8x1xf32>
    %52 = vector.broadcast %51 : vector<8x1xf32> to vector<8x64xf32>
    %53 = arith.mulf %43, %52 : vector<8x64xf32>
    %cst_54 = arith.constant 0.000000e+00 : f32
    %54 = vector.broadcast %cst_54 : f32 to vector<8x64xf32>
    %55 = arith.cmpf oge, %53, %54 : vector<8x64xf32>
    %cst_55 = arith.constant 0.00999999977 : f32
    %56 = vector.broadcast %cst_55 : f32 to vector<8x64xf32>
    %57 = arith.mulf %56, %53 : vector<8x64xf32>
    %58 = arith.select %55, %53, %57 : vector<8x64xi1>, vector<8x64xf32>
    %cst_56 = arith.constant 0.000000e+00 : bf16
    %59 = vector.broadcast %cst_56 : bf16 to vector<8x9xbf16>
    %c0_57 = arith.constant 0 : index
    %c0_58 = arith.constant 0 : index
    %60 = vector.load %arg8[%c0_57, %c0_58] : memref<8x128xbf16, #tpu.memory_space<vmem>>, vector<8x9xbf16>
    tpu.vector_store %arg8[%c0_57, %c0_58], %59 {strides = array<i32>} : memref<8x128xbf16, #tpu.memory_space<vmem>>, vector<8x9xbf16>,
    %cst_59 = arith.constant 0.000000e+00 : bf16
    %61 = vector.broadcast %cst_59 : bf16 to vector<8x55xbf16>
    %c0_60 = arith.constant 0 : index
    %c73 = arith.constant 73 : index
    %62 = vector.load %arg8[%c0_60, %c73] : memref<8x128xbf16, #tpu.memory_space<vmem>>, vector<8x55xbf16>
    tpu.vector_store %arg8[%c0_60, %c73], %61 {strides = array<i32>} : memref<8x128xbf16, #tpu.memory_space<vmem>>, vector<8x55xbf16>,
    %63 = arith.truncf %58 : vector<8x64xf32> to vector<8x64xbf16>
    %c0_61 = arith.constant 0 : index
    %c9_62 = arith.constant 9 : index
    %64 = vector.load %arg8[%c0_61, %c9_62] : memref<8x128xbf16, #tpu.memory_space<vmem>>, vector<8x64xbf16>
    tpu.vector_store %arg8[%c0_61, %c9_62], %63 {strides = array<i32>} : memref<8x128xbf16, #tpu.memory_space<vmem>>, vector<8x64xbf16>,
    %c0_63 = arith.constant 0 : index
    %c0_64 = arith.constant 0 : index
    %65 = vector.load %arg8[%c0_63, %c0_64] : memref<8x128xbf16, #tpu.memory_space<vmem>>, vector<8x64xbf16>
    %66 = vector.broadcast %0 : vector<1x64xbf16> to vector<8x64xbf16>
    %67 = arith.mulf %65, %66 : vector<8x64xbf16>
    %c0_65 = arith.constant 0 : index
    %c0_66 = arith.constant 0 : index
    %68 = vector.load %arg7[%c0_65, %c0_66] : memref<72x64xbf16, #tpu.memory_space<vmem>>, vector<8x64xbf16>
    tpu.vector_store %arg7[%c0_65, %c0_66], %67 {strides = array<i32>} : memref<72x64xbf16, #tpu.memory_space<vmem>>, vector<8x64xbf16>,
    %c0_67 = arith.constant 0 : index
    %c1_68 = arith.constant 1 : index
    %69 = vector.load %arg8[%c0_67, %c1_68] : memref<8x128xbf16, #tpu.memory_space<vmem>>, vector<8x64xbf16>
    %c8_69 = arith.constant 8 : index
    %c0_70 = arith.constant 0 : index
    %70 = vector.load %arg7[%c8_69, %c0_70] : memref<72x64xbf16, #tpu.memory_space<vmem>>, vector<8x64xbf16>
    tpu.vector_store %arg7[%c8_69, %c0_70], %69 {strides = array<i32>} : memref<72x64xbf16, #tpu.memory_space<vmem>>, vector<8x64xbf16>,
    %c0_71 = arith.constant 0 : index
    %c2_72 = arith.constant 2 : index
    %71 = vector.load %arg8[%c0_71, %c2_72] : memref<8x128xbf16, #tpu.memory_space<vmem>>, vector<8x64xbf16>
    %72 = vector.broadcast %1 : vector<1x64xbf16> to vector<8x64xbf16>
    %73 = arith.mulf %71, %72 : vector<8x64xbf16>
    %c16_73 = arith.constant 16 : index
    %c0_74 = arith.constant 0 : index
    %74 = vector.load %arg7[%c16_73, %c0_74] : memref<72x64xbf16, #tpu.memory_space<vmem>>, vector<8x64xbf16>
    tpu.vector_store %arg7[%c16_73, %c0_74], %73 {strides = array<i32>} : memref<72x64xbf16, #tpu.memory_space<vmem>>, vector<8x64xbf16>,
    %c0_75 = arith.constant 0 : index
    %c8_76 = arith.constant 8 : index
    %75 = vector.load %arg8[%c0_75, %c8_76] : memref<8x128xbf16, #tpu.memory_space<vmem>>, vector<8x64xbf16>
    %76 = vector.broadcast %0 : vector<1x64xbf16> to vector<8x64xbf16>
    %77 = arith.mulf %75, %76 : vector<8x64xbf16>
    %c24_77 = arith.constant 24 : index
    %c0_78 = arith.constant 0 : index
    %78 = vector.load %arg7[%c24_77, %c0_78] : memref<72x64xbf16, #tpu.memory_space<vmem>>, vector<8x64xbf16>
    tpu.vector_store %arg7[%c24_77, %c0_78], %77 {strides = array<i32>} : memref<72x64xbf16, #tpu.memory_space<vmem>>, vector<8x64xbf16>,
    %c0_79 = arith.constant 0 : index
    %c9_80 = arith.constant 9 : index
    %79 = vector.load %arg8[%c0_79, %c9_80] : memref<8x128xbf16, #tpu.memory_space<vmem>>, vector<8x64xbf16>
    %c32_81 = arith.constant 32 : index
    %c0_82 = arith.constant 0 : index
    %80 = vector.load %arg7[%c32_81, %c0_82] : memref<72x64xbf16, #tpu.memory_space<vmem>>, vector<8x64xbf16>
    tpu.vector_store %arg7[%c32_81, %c0_82], %79 {strides = array<i32>} : memref<72x64xbf16, #tpu.memory_space<vmem>>, vector<8x64xbf16>,
    %c0_83 = arith.constant 0 : index
    %c10 = arith.constant 10 : index
    %81 = vector.load %arg8[%c0_83, %c10] : memref<8x128xbf16, #tpu.memory_space<vmem>>, vector<8x64xbf16>
    %82 = vector.broadcast %1 : vector<1x64xbf16> to vector<8x64xbf16>
    %83 = arith.mulf %81, %82 : vector<8x64xbf16>
    %c40 = arith.constant 40 : index
    %c0_84 = arith.constant 0 : index
    %84 = vector.load %arg7[%c40, %c0_84] : memref<72x64xbf16, #tpu.memory_space<vmem>>, vector<8x64xbf16>
    tpu.vector_store %arg7[%c40, %c0_84], %83 {strides = array<i32>} : memref<72x64xbf16, #tpu.memory_space<vmem>>, vector<8x64xbf16>,
    %c0_85 = arith.constant 0 : index
    %c16_86 = arith.constant 16 : index
    %85 = vector.load %arg8[%c0_85, %c16_86] : memref<8x128xbf16, #tpu.memory_space<vmem>>, vector<8x64xbf16>
    %86 = vector.broadcast %0 : vector<1x64xbf16> to vector<8x64xbf16>
    %87 = arith.mulf %85, %86 : vector<8x64xbf16>
    %c48 = arith.constant 48 : index
    %c0_87 = arith.constant 0 : index
    %88 = vector.load %arg7[%c48, %c0_87] : memref<72x64xbf16, #tpu.memory_space<vmem>>, vector<8x64xbf16>
    tpu.vector_store %arg7[%c48, %c0_87], %87 {strides = array<i32>} : memref<72x64xbf16, #tpu.memory_space<vmem>>, vector<8x64xbf16>,
    %c0_88 = arith.constant 0 : index
    %c17 = arith.constant 17 : index
    %89 = vector.load %arg8[%c0_88, %c17] : memref<8x128xbf16, #tpu.memory_space<vmem>>, vector<8x64xbf16>
    %c56 = arith.constant 56 : index
    %c0_89 = arith.constant 0 : index
    %90 = vector.load %arg7[%c56, %c0_89] : memref<72x64xbf16, #tpu.memory_space<vmem>>, vector<8x64xbf16>
    tpu.vector_store %arg7[%c56, %c0_89], %89 {strides = array<i32>} : memref<72x64xbf16, #tpu.memory_space<vmem>>, vector<8x64xbf16>,
    %c0_90 = arith.constant 0 : index
    %c18 = arith.constant 18 : index
    %91 = vector.load %arg8[%c0_90, %c18] : memref<8x128xbf16, #tpu.memory_space<vmem>>, vector<8x64xbf16>
    %92 = vector.broadcast %1 : vector<1x64xbf16> to vector<8x64xbf16>
    %93 = arith.mulf %91, %92 : vector<8x64xbf16>
    %c64 = arith.constant 64 : index
    %c0_91 = arith.constant 0 : index
    %94 = vector.load %arg7[%c64, %c0_91] : memref<72x64xbf16, #tpu.memory_space<vmem>>, vector<8x64xbf16>
    tpu.vector_store %arg7[%c64, %c0_91], %93 {strides = array<i32>} : memref<72x64xbf16, #tpu.memory_space<vmem>>, vector<8x64xbf16>,
    %c0_92 = arith.constant 0 : index
    %c0_93 = arith.constant 0 : index
    %95 = vector.load %arg4[%c0_92, %c0_93] : memref<8x72xbf16, #tpu.memory_space<vmem>>, vector<8x72xbf16>
    %c0_94 = arith.constant 0 : index
    %c0_95 = arith.constant 0 : index
    %96 = vector.load %arg7[%c0_94, %c0_95] : memref<72x64xbf16, #tpu.memory_space<vmem>>, vector<72x64xbf16>
    %cst_96 = arith.constant dense<0.000000e+00> : vector<8x64xf32>
    %97 = tpu.matmul %95, %96, %cst_96 {dimension_numbers = #tpu.dot_dimension_numbers<[1], [0], [0], [1], [0, 0, 1, 1], [], []>} : vector<8x72xbf16>, vector<72x64xbf16>, vector<8x64xf32> -> vector<8x64xf32>
    %cst_97 = arith.constant dense<0.000000e+00> : vector<8xf32>
    %98 = vector.multi_reduction <add>, %97, %cst_97 [1] : vector<8x64xf32> to vector<8xf32>
    %99 = vector.shape_cast %98 : vector<8xf32> to vector<8x1xf32>
    %cst_98 = arith.constant 1.562500e-02 : f32
    %100 = vector.broadcast %cst_98 : f32 to vector<8x1xf32>
    %101 = arith.mulf %99, %100 : vector<8x1xf32>
    %102 = vector.broadcast %101 : vector<8x1xf32> to vector<8x64xf32>
    %103 = arith.subf %97, %102 : vector<8x64xf32>
    %104 = arith.mulf %103, %103 : vector<8x64xf32>
    %cst_99 = arith.constant dense<0.000000e+00> : vector<8xf32>
    %105 = vector.multi_reduction <add>, %104, %cst_99 [1] : vector<8x64xf32> to vector<8xf32>
    %106 = vector.shape_cast %105 : vector<8xf32> to vector<8x1xf32>
    %cst_100 = arith.constant 1.562500e-02 : f32
    %107 = vector.broadcast %cst_100 : f32 to vector<8x1xf32>
    %108 = arith.mulf %106, %107 : vector<8x1xf32>
    %cst_101 = arith.constant 9.99999974E-6 : f32
    %109 = vector.broadcast %cst_101 : f32 to vector<8x1xf32>
    %110 = arith.addf %108, %109 : vector<8x1xf32>
    %111 = math.rsqrt %110 : vector<8x1xf32>
    %112 = vector.broadcast %111 : vector<8x1xf32> to vector<8x64xf32>
    %113 = arith.mulf %103, %112 : vector<8x64xf32>
    %cst_102 = arith.constant 0.000000e+00 : f32
    %114 = vector.broadcast %cst_102 : f32 to vector<8x64xf32>
    %115 = arith.cmpf oge, %113, %114 : vector<8x64xf32>
    %cst_103 = arith.constant 0.00999999977 : f32
    %116 = vector.broadcast %cst_103 : f32 to vector<8x64xf32>
    %117 = arith.mulf %116, %113 : vector<8x64xf32>
    %118 = arith.select %115, %113, %117 : vector<8x64xi1>, vector<8x64xf32>
    %c0_104 = arith.constant 0 : index
    %c0_105 = arith.constant 0 : index
    %c0_106 = arith.constant 0 : index
    %119 = vector.load %arg5[%c0_104, %c0_105, %c0_106] : memref<1x8x64xf32, #tpu.memory_space<vmem>>, vector<1x8x64xf32>
    %120 = vector.shape_cast %119 : vector<1x8x64xf32> to vector<8x64xf32>
    %121 = vector.shape_cast %118 : vector<8x64xf32> to vector<1x8x64xf32>
    tpu.vector_store %arg5[%c0_104, %c0_105, %c0_106], %121 {strides = array<i32>} : memref<1x8x64xf32, #tpu.memory_space<vmem>>, vector<1x8x64xf32>,
    return
  }
  func.func @transform_0(%arg0: i32) -> (i32, i32) {
    %c0_i32 = arith.constant 0 : i32
    %c0_i32_0 = arith.constant 0 : i32
    %c0_i32_1 = arith.constant 0 : i32
    return %c0_i32, %c0_i32_0 : i32, i32
  }
  func.func @transform_1(%arg0: i32) -> (i32, i32, i32, i32) {
    %c0_i32 = arith.constant 0 : i32
    %c0_i32_0 = arith.constant 0 : i32
    %c0_i32_1 = arith.constant 0 : i32
    %c0_i32_2 = arith.constant 0 : i32
    return %arg0, %c0_i32, %c0_i32_0, %c0_i32_1 : i32, i32, i32, i32
  }
  func.func @transform_2(%arg0: i32) -> (i32, i32) {
    %c0_i32 = arith.constant 0 : i32
    %c0_i32_0 = arith.constant 0 : i32
    %c0_i32_1 = arith.constant 0 : i32
    return %c0_i32, %c0_i32_0 : i32, i32
  }
  func.func @transform_3(%arg0: i32) -> (i32, i32) {
    %c0_i32 = arith.constant 0 : i32
    %c0_i32_0 = arith.constant 0 : i32
    %c0_i32_1 = arith.constant 0 : i32
    return %c0_i32, %c0_i32_0 : i32, i32
  }
  func.func @transform_4(%arg0: i32) -> (i32, i32, i32) {
    %c0_i32 = arith.constant 0 : i32
    %c0_i32_0 = arith.constant 0 : i32
    %c0_i32_1 = arith.constant 0 : i32
    return %arg0, %c0_i32, %c0_i32_0 : i32, i32, i32
  }
}

</mosaic_0001>

<llo_original>
// kernel: down_forward.1
$region0: #{down_forward.1}
  #allocation0 [shape = 'u32[]', space=smem, size = 0x4, offset = 0x4, fixed_abs, tag = 'smem constant byte address 0x4 - core index']
  #allocation1 [shape = 'u32[144,128]{1,0:T(1,128)}', space=vmem, size = 0x12000, scoped, tag = 'internal scratch']
  #allocation2 [shape = 'bf16[36,64]{1,0:T(8,128)(2,1)}', space=vmem, size = 0x2800, scoped, tag = 'scratch operand']
  #allocation3 [shape = 'bf16[72,64]{1,0:T(8,128)(2,1)}', space=vmem, size = 0x4800, scoped, tag = 'scratch operand']
  #allocation4 [shape = 'bf16[8,128]{1,0:T(8,128)(2,1)}', space=vmem, size = 0x800, scoped, tag = 'scratch operand']
  %s0 = inlined_call_operand.vmem [shape: bf16[2,64], index: 0, kind: input, shape index: {}]
  %s1 = inlined_call_operand.vmem [shape: bf16[2,4,4,128], index: 1, kind: input, shape index: {}]
  %s2 = inlined_call_operand.vmem [shape: bf16[8,36], index: 2, kind: input, shape index: {}]
  %s3 = inlined_call_operand.vmem [shape: bf16[8,72], index: 3, kind: input, shape index: {}]
  %s4 = inlined_call_operand.vmem [shape: f32[2,8,64], index: 4, kind: output, shape index: {}]
  %s5 = sld [smem:[#allocation0]]
  $region49: #{down_forward.1} parent=0
    _
  %s7 = ssub.s32 1, %s5
  %s8 = scalar_select 0, %s7, %s5
  loop: start=0, step=1, limit=4
  $region2: #{down_forward.1} parent=0 // loop_pre_header
    _
  $region3: #{down_forward.1} parent=0 // loop_header
    %s10 = sphi 0, %s14
    %p11 = scmp.ge.s32.totalorder %s10, 4
    %s18 = sphi 0, %s18
    %s20 = sphi 0, %s18
    %s21 = sphi 0, %s20
    %s35 = sphi 0, %s21
    %s41 = sphi 0, %s43
    %s44 = sphi 0, %s41
    %s45 = sphi 0, %s44
    %s61 = sphi 0, %s45
    %s65 = sphi 0, %s65
    %s67 = sphi 0, %s65
    %s68 = sphi 0, %s67
    %s82 = sphi 0, %s68
    %s86 = sphi 0, %s86
    %s88 = sphi 0, %s86
    %s89 = sphi 0, %s88
    %s103 = sphi 0, %s89
    %s109 = sphi 0, %s111
    %s112 = sphi 0, %s109
    %s113 = sphi 0, %s112
    %s129 = sphi 0, %s113
  $region4: #{down_forward.1} parent=0 // loop_header_branch
    %13 = sbr.rel (%p11) target = $region8
  $region5: #{down_forward.1} parent=0 // loop_body
    %s15 = ssub.s32 %s10, 1
    %s16 = ssub.s32 %s10, 2
    %s17 = sadd.s32 %s10, 1
    %s19 = sadd.s32 %s18, 1
    %p22 = scmp.eq.s32.totalorder %s10, 1
    %p23 = scmp.ne.s32.totalorder %s18, %s20
    %p24 = scmp.eq.s32.totalorder %s10, 0
    %p25 = por %p23, %p24
    %p26 = scmp.ne.s32.totalorder %s18, %s20
    %p27 = scmp.eq.s32.totalorder %s15, 1
    %p28 = por %p26, %p27
    %p29 = scmp.ne.s32.totalorder %s20, %s21
    %p30 = scmp.eq.s32.totalorder %s15, 0
    %p31 = por %p29, %p30
    %p32 = scmp.ne.s32.totalorder %s20, %s21
    %p33 = scmp.eq.s32.totalorder %s16, 1
    %p34 = por %p32, %p33
    %p36 = scmp.ne.s32.totalorder %s21, %s35
    %p37 = scmp.eq.s32.totalorder %s16, 0
    %p38 = por %p36, %p37
    %s39 = ssub.s32 %s10, %s17
    %p40 = scmp.eq.s32.totalorder %s39, 0
    %s42 = sadd.s32 %s41, 1
    %s43 = scalar_select %p40, %s41, %s42
    %p46 = pneg %p40
    %p47 = scmp.eq.s32.totalorder %s10, 1
    %p48 = por %p46, %p47
    %p49 = scmp.ne.s32.totalorder %s41, %s44
    %p50 = scmp.eq.s32.totalorder %s10, 0
    %p51 = por %p49, %p50
    %p52 = scmp.ne.s32.totalorder %s41, %s44
    %p53 = scmp.eq.s32.totalorder %s15, 1
    %p54 = por %p52, %p53
    %p55 = scmp.ne.s32.totalorder %s44, %s45
    %p56 = scmp.eq.s32.totalorder %s15, 0
    %p57 = por %p55, %p56
    %p58 = scmp.ne.s32.totalorder %s44, %s45
    %p59 = scmp.eq.s32.totalorder %s16, 1
    %p60 = por %p58, %p59
    %p62 = scmp.ne.s32.totalorder %s45, %s61
    %p63 = scmp.eq.s32.totalorder %s16, 0
    %p64 = por %p62, %p63
    %s66 = sadd.s32 %s65, 1
    %p69 = scmp.eq.s32.totalorder %s10, 1
    %p70 = scmp.ne.s32.totalorder %s65, %s67
    %p71 = scmp.eq.s32.totalorder %s10, 0
    %p72 = por %p70, %p71
    %p73 = scmp.ne.s32.totalorder %s65, %s67
    %p74 = scmp.eq.s32.totalorder %s15, 1
    %p75 = por %p73, %p74
    %p76 = scmp.ne.s32.totalorder %s67, %s68
    %p77 = scmp.eq.s32.totalorder %s15, 0
    %p78 = por %p76, %p77
    %p79 = scmp.ne.s32.totalorder %s67, %s68
    %p80 = scmp.eq.s32.totalorder %s16, 1
    %p81 = por %p79, %p80
    %p83 = scmp.ne.s32.totalorder %s68, %s82
    %p84 = scmp.eq.s32.totalorder %s16, 0
    %p85 = por %p83, %p84
    %s87 = sadd.s32 %s86, 1
    %p90 = scmp.eq.s32.totalorder %s10, 1
    %p91 = scmp.ne.s32.totalorder %s86, %s88
    %p92 = scmp.eq.s32.totalorder %s10, 0
    %p93 = por %p91, %p92
    %p94 = scmp.ne.s32.totalorder %s86, %s88
    %p95 = scmp.eq.s32.totalorder %s15, 1
    %p96 = por %p94, %p95
    %p97 = scmp.ne.s32.totalorder %s88, %s89
    %p98 = scmp.eq.s32.totalorder %s15, 0
    %p99 = por %p97, %p98
    %p100 = scmp.ne.s32.totalorder %s88, %s89
    %p101 = scmp.eq.s32.totalorder %s16, 1
    %p102 = por %p100, %p101
    %p104 = scmp.ne.s32.totalorder %s89, %s103
    %p105 = scmp.eq.s32.totalorder %s16, 0
    %p106 = por %p104, %p105
    %s107 = ssub.s32 %s10, %s17
    %p108 = scmp.eq.s32.totalorder %s107, 0
    %s110 = sadd.s32 %s109, 1
    %s111 = scalar_select %p108, %s109, %s110
    %p114 = pneg %p108
    %p115 = scmp.eq.s32.totalorder %s10, 1
    %p116 = por %p114, %p115
    %p117 = scmp.ne.s32.totalorder %s109, %s112
    %p118 = scmp.eq.s32.totalorder %s10, 0
    %p119 = por %p117, %p118
    %p120 = scmp.ne.s32.totalorder %s109, %s112
    %p121 = scmp.eq.s32.totalorder %s15, 1
    %p122 = por %p120, %p121
    %p123 = scmp.ne.s32.totalorder %s112, %s113
    %p124 = scmp.eq.s32.totalorder %s15, 0
    %p125 = por %p123, %p124
    %p126 = scmp.ne.s32.totalorder %s112, %s113
    %p127 = scmp.eq.s32.totalorder %s16, 1
    %p128 = por %p126, %p127
    %p130 = scmp.ne.s32.totalorder %s113, %s129
    %p131 = scmp.eq.s32.totalorder %s16, 0
    %p132 = por %p130, %p131
    %p133 = scmp.le.s32.totalorder 1, %s10
    %p134 = scmp.lt.s32.totalorder %s10, 3
    %p135 = pnand %p133, %p134
    %p136 = pneg %p135
    // Predicated region
    $region9: #{down_forward.1} parent=5 // pred_check
      _
    $region10: #{down_forward.1} parent=5 // pred_check_branch
      %138 = sbr.rel (%p135) target = $region12
    $region11: #{down_forward.1} parent=5 // pred_region
      %s139 = ssub.s32 %s10, 1
      // Predicated region
      $region13: #{down_forward.1} parent=11 // pred_check
        %p140 = pneg %p31
      $region14: #{down_forward.1} parent=11 // pred_check_branch
        %142 = sbr.rel (%p140) target = $region16
      $region15: #{down_forward.1} parent=11 // pred_region
        _
      $region16: #{down_forward.1} parent=11 // pred_fallthru
        _
      // Predicated region
      $region17: #{down_forward.1} parent=11 // pred_check
        %p143 = pneg %p78
      $region18: #{down_forward.1} parent=11 // pred_check_branch
        %145 = sbr.rel (%p143) target = $region20
      $region19: #{down_forward.1} parent=11 // pred_region
        _
      $region20: #{down_forward.1} parent=11 // pred_fallthru
        _
      // Predicated region
      $region21: #{down_forward.1} parent=11 // pred_check
        %p146 = pneg %p99
      $region22: #{down_forward.1} parent=11 // pred_check_branch
        %148 = sbr.rel (%p146) target = $region24
      $region23: #{down_forward.1} parent=11 // pred_region
        _
      $region24: #{down_forward.1} parent=11 // pred_fallthru
        _
    $region12: #{down_forward.1} parent=5 // pred_fallthru
      _
    %p149 = scmp.lt.s32.totalorder %s10, 2
    // Predicated region
    $region25: #{down_forward.1} parent=5 // pred_check
      %p150 = pneg %p149
    $region26: #{down_forward.1} parent=5 // pred_check_branch
      %152 = sbr.rel (%p150) target = $region28
    $region27: #{down_forward.1} parent=5 // pred_region
      // Predicated region
      $region29: #{down_forward.1} parent=27 // pred_check
        %p153 = pneg %p51
      $region30: #{down_forward.1} parent=27 // pred_check_branch
        %155 = sbr.rel (%p153) target = $region32
      $region31: #{down_forward.1} parent=27 // pred_region
        %p156 = scmp.lt.s32.totalorder %s10, 1
        %s157 = scalar_select %p156, %s10, 1
        %s158 = smul.addr %s157, 4
        %s159 = smul.addr %s158, 2
        %s160 = scalar_lea.vmem %s1, %s159
      $region32: #{down_forward.1} parent=27 // pred_fallthru
        _
    $region28: #{down_forward.1} parent=5 // pred_fallthru
      _
    %p161 = scmp.le.s32.totalorder 1, %s10
    %p162 = scmp.lt.s32.totalorder %s10, 3
    %p163 = pnand %p161, %p162
    %p164 = pneg %p163
    // Predicated region
    $region33: #{down_forward.1} parent=5 // pred_check
      _
    $region34: #{down_forward.1} parent=5 // pred_check_branch
      %166 = sbr.rel (%p163) target = $region36
    $region35: #{down_forward.1} parent=5 // pred_region
      %s167 = ssub.s32 %s10, 1
      %p168 = pneg %p31
      %p169 = pneg %p28
      %p170 = scmp.lt.s32.totalorder %s15, 1
      %s171 = scalar_select %p170, %s15, 1
      %s172 = smul.addr %s171, 4
      %s173 = smul.addr %s172, 2
      %s174 = scalar_lea.vmem %s1, %s173
      %p175 = pneg %p57
      %p176 = pneg %p54
      %p177 = pneg %p78
      %p178 = pneg %p75
      %p179 = pneg %p99
      %p180 = pneg %p96
      %p181 = pneg %p125
      %p182 = pneg %p122
      %p183 = scmp.lt.s32.totalorder %s15, 1
      %s184 = scalar_select %p183, %s15, 1
      %s185 = smul.addr %s184, 8
      %s186 = scalar_lea.vmem %s4, %s185
      %p187 = scmp.lt.s32.totalorder %s15, 1
      %s188 = scalar_select %p187, %s15, 1
      %s189 = smul.addr %s188, 4
      %s190 = smul.addr %s189, 2
      %s191 = scalar_lea.vmem %s1, %s190
      %p192 = scmp.lt.s32.totalorder %s15, 1
      %s193 = scalar_select %p192, %s15, 1
      %s194 = smul.addr %s193, 8
      %s195 = scalar_lea.vmem %s4, %s194
      %v197 = vld [vmem:[%s0] sm:$0x1]
      %s198 = scalar_lea.vmem %s191, 2
      %v199 = vld [vmem:[%s198] sm:$0x3]
      %v201 = vpack.i.b16 %v197, %v197
      %v203 = vlaneseq
      %v204 = vshrl.u32 %v203, 7
      %v205 = vsub.s32 0, %v204
      %v206 = vrot.slane %v201, %v205
      %v207 = vmul.bf16 %v199, %v206
      %vm208 = vcmask 517120
      %209 = vst.msk [vmem:[#allocation2] sm:$0x3] %vm208, %v207
      %v210 = vld [vmem:[%s191] sm:$0x3]
      %v212 = vcombine.low %v210, %v210
      %v214 = vunpack.c.l.s4 1983009808
      %v215 = vunpack.c.0.s8 %v214
      %v216 = vlaneseq
      %v217 = vshrl.u32 %v216, 7
      %v218 = vsub.s32 %v215, %v217
      %v219 = vrot.slane %v212, %v218
      %220 = vrot.lane.b32.xlu0 %v219, 127
      %v221 = vpop.permute.xlu0 %220
      %vm223 = vcmask 519170
      %224 = vst.msk [vmem:[#allocation2] sm:$0xc] %vm223, %v221
      %v225 = vld [vmem:[%s198] sm:$0x3]
      %v228 = vunpack.c.l.s4 1983009808
      %v229 = vunpack.c.0.s8 %v228
      %v230 = vlaneseq
      %v231 = vshrl.u32 %v230, 7
      %v232 = vsub.s32 %v229, %v231
      %v233 = vrot.slane %v225, %v232
      %234 = vrot.lane.b32.xlu0 %v233, 127
      %v235 = vpop.permute.xlu0 %234
      %237 = vst.msk [vmem:[#allocation2 + $0x4] sm:$0x3] %vm208, %v235
      %s238 = scalar_lea.vmem %s191, 6
      %v239 = vld [vmem:[%s238] sm:$0x3]
      %v240 = vmul.bf16 %v239, %v206
      %v242 = vcombine.low %v240, %v240
      %v244 = vunpack.c.l.s4 1983009808
      %v245 = vunpack.c.0.s8 %v244
      %v246 = vlaneseq
      %v247 = vshrl.u32 %v246, 7
      %v248 = vsub.s32 %v245, %v247
      %v249 = vrot.slane %v242, %v248
      %251 = vst.msk [vmem:[#allocation2 + $0x4] sm:$0xc] %vm223, %v249
      %s252 = scalar_lea.vmem %s191, 4
      %v253 = vld [vmem:[%s252] sm:$0x3]
      %v256 = vunpack.c.l.s4 1983009808
      %v257 = vunpack.c.0.s8 %v256
      %v258 = vlaneseq
      %v259 = vshrl.u32 %v258, 7
      %v260 = vsub.s32 %v257, %v259
      %v261 = vrot.slane %v253, %v260
      %262 = vrot.lane.b32.xlu0 %v261, 127
      %v263 = vpop.permute.xlu0 %262
      %265 = vst.msk [vmem:[#allocation2 + $0x8] sm:$0x3] %vm208, %v263
      %v266 = vld [vmem:[%s238] sm:$0x3]
      %v268 = vcombine.low %v266, %v266
      %v270 = vunpack.c.l.s4 1983009808
      %v271 = vunpack.c.0.s8 %v270
      %v272 = vlaneseq
      %v273 = vshrl.u32 %v272, 7
      %v274 = vsub.s32 %v271, %v273
      %v275 = vrot.slane %v268, %v274
      %276 = vrot.lane.b32.xlu0 %v275, 127
      %v277 = vpop.permute.xlu0 %276
      %279 = vst.msk [vmem:[#allocation2 + $0x8] sm:$0xc] %vm223, %v277
      %v280 = vld [vmem:[%s198] sm:$0x3]
      %v283 = vunpack.c.l.s4 1983009808
      %v284 = vunpack.c.0.s8 %v283
      %v285 = vlaneseq
      %v286 = vshrl.u32 %v285, 7
      %v287 = vsub.s32 %v284, %v286
      %v288 = vrot.slane %v206, %v287
      %289 = vrot.lane.b32.xlu0 %v288, 8
      %v290 = vpop.permute.xlu0 %289
      %v292 = vmul.bf16 %v280, %v290
      %v295 = vunpack.c.l.s4 1983009808
      %v296 = vunpack.c.0.s8 %v295
      %v297 = vlaneseq
      %v298 = vshrl.u32 %v297, 7
      %v299 = vsub.s32 %v296, %v298
      %v300 = vrot.slane %v292, %v299
      %301 = vrot.lane.b32.xlu0 %v300, 120
      %v302 = vpop.permute.xlu0 %301
      %304 = vst.msk [vmem:[#allocation2 + $0xc] sm:$0x3] %vm208, %v302
      %v305 = vld [vmem:[%s191] sm:$0x3]
      %v307 = vcombine.low %v305, %v305
      %v309 = vunpack.c.l.s4 1983009808
      %v310 = vunpack.c.0.s8 %v309
      %v311 = vlaneseq
      %v312 = vshrl.u32 %v311, 7
      %v313 = vsub.s32 %v310, %v312
      %v314 = vrot.slane %v307, %v313
      %315 = vrot.lane.b32.xlu0 %v314, 119
      %v316 = vpop.permute.xlu0 %315
      %318 = vst.msk [vmem:[#allocation2 + $0xc] sm:$0xc] %vm223, %v316
      %v319 = vld [vmem:[%s198] sm:$0x3]
      %v322 = vunpack.c.l.s4 1983009808
      %v323 = vunpack.c.0.s8 %v322
      %v324 = vlaneseq
      %v325 = vshrl.u32 %v324, 7
      %v326 = vsub.s32 %v323, %v325
      %v327 = vrot.slane %v319, %v326
      %328 = vrot.lane.b32.xlu0 %v327, 119
      %v329 = vpop.permute.xlu0 %328
      %331 = vst.msk [vmem:[#allocation2 + $0x10] sm:$0x3] %vm208, %v329
      %v332 = vld [vmem:[%s2] sm:$0xf]
      %v333 = vld [vmem:[#allocation2] sm:$0xf]
      %v334 = vld [vmem:[#allocation2 + $0x4] sm:$0xf]
      %v335 = vld [vmem:[#allocation2 + $0x8] sm:$0xf]
      %v336 = vld [vmem:[#allocation2 + $0xc] sm:$0xf]
      %v337 = vld [vmem:[#allocation2 + $0x10] sm:$0x3]
      %v343 = vunpack.c.l.b16 %v333
      %v344 = vunpack.c.l.b16 %v334
      %v345 = vunpack.c.l.b16 %v335
      %v346 = vunpack.c.l.b16 %v336
      %v347 = vunpack.c.l.b16 %v337
      %v348 = vpack.c.b16 %v344, %v343
      %v349 = vpack.c.b16 %v346, %v345
      %v350 = vpack.c.b16 %v347, %v347
      %vm353 = vcmask 293888
      %v355 = vsel %vm353, %v332, 0
      %vm357 = vcmask 1041408
      %v359 = vsel %vm357, %v350, 0
      %361 = vmatprep.subr.bf16.mxu0 0
      %362 = vmatpush1.bf16.msra.mxu0 %v348
      %363 = vmatprep.subr.bf16.mxu0 0
      %364 = vmatpush1.bf16.msra.mxu0 %v349
      %365 = vmatprep.subr.bf16.mxu0 0
      %366 = vmatpush1.bf16.msra.mxu0 %v359
      %367 = vmatprep.subr.bf16.mxu0 0
      %368 = vmatpush1.bf16.msra.mxu0 0
      %369 = vmatprep.subr.bf16.mxu0 0
      %370 = vmatpush1.bf16.msra.mxu0 0
      %371 = vmatprep.subr.bf16.mxu0 0
      %372 = vmatpush1.bf16.msra.mxu0 0
      %373 = vmatprep.subr.bf16.mxu0 0
      %374 = vmatpush1.bf16.msra.mxu0 0
      %375 = vmatprep.subr.bf16.mxu0 0
      %376 = vmatpush1.bf16.msra.mxu0 0
      %377 = vmatprep.subr.bf16.mxu0 0
      %378 = vmatpush1.bf16.msra.mxu0 0
      %379 = vmatprep.subr.bf16.mxu0 0
      %380 = vmatpush1.bf16.msra.mxu0 0
      %381 = vmatprep.subr.bf16.mxu0 0
      %382 = vmatpush1.bf16.msra.mxu0 0
      %383 = vmatprep.subr.bf16.mxu0 0
      %384 = vmatpush1.bf16.msra.mxu0 0
      %385 = vmatprep.subr.bf16.mxu0 0
      %386 = vmatpush1.bf16.msra.mxu0 0
      %387 = vmatprep.subr.bf16.mxu0 0
      %388 = vmatpush1.bf16.msra.mxu0 0
      %389 = vmatprep.subr.bf16.mxu0 0
      %390 = vmatpush1.bf16.msra.mxu0 0
      %391 = vmatprep.subr.bf16.mxu0 0
      %392 = vmatpush1.bf16.msra.mxu0 0
      %393 = vmatprep.mubr.bf16.mxu0 0
      %394 = vmatmul.mubr.bf16.gmra.mrb[0].mxu0 %v355
      %v395 = vpop.f32.mrb[0].mxu0
      %v396 = vadd.f32 0.0, %v395
      %v397 = vpop.f32.mrb[0].mxu0
      %v398 = vpop.f32.mrb[0].mxu0
      %v399 = vpop.f32.mrb[0].mxu0
      %400 = vdwg.mxu0
      %vm401 = vcmask 523264
      %v402 = vsel %vm401, %v396, 0.0
      %403 = vadd.xlane.f32.xlu0 %v402
      %v404 = vpop.xlane.xlu0 %403
      %v405 = vmul.f32 %v404, 0.015625
      %v406 = vsub.f32 %v396, %v405
      %v407 = vmul.f32 %v406, %v406
      %v408 = vsel %vm401, %v407, 0.0
      %409 = vadd.xlane.f32.xlu0 %v408
      %v410 = vpop.xlane.xlu0 %409
      %v411 = vmul.f32 %v410, 0.015625
      %v412 = vadd.f32 %v411, 1e-05
      %v413 = vrsqrt.pop %v412
      %v414 = vmul.f32 %v406, %v413
      %vm415 = vcmp.ge.f32.partialorder %v414, 0.0
      %v416 = vmul.f32 %v414, 0.01
      %v417 = vsel %vm415, %v414, %v416
      %vm418 = vcmask 68608
      %419 = vst.msk [vmem:[#allocation4] sm:$0xf] %vm418, 0
      %vm420 = vcmask 1044040
      %421 = vst.msk [vmem:[#allocation4] sm:$0xf] %vm420, 0
      %v422 = vpack.c.bf16 %v417, %v417
      %v424 = vunpack.c.l.b16 %v422
      %v425 = vpack.c.b16 %v424, %v424
      %426 = vrot.lane.b32.xlu0 %v425, 9
      %v427 = vpop.permute.xlu0 %426
      %vm429 = vcmask 592968
      %430 = vst.msk [vmem:[#allocation4] sm:$0xf] %vm429, %v427
      %v431 = vld [vmem:[#allocation4] sm:$0xf]
      %v432 = vmul.bf16 %v431, %v206
      %vm433 = vcmask 519168
      %434 = vst.msk [vmem:[#allocation3] sm:$0xf] %vm433, %v432
      %v435 = vld [vmem:[#allocation4] sm:$0xf]
      %437 = vrot.lane.b32.xlu0 %v435, 127
      %v438 = vpop.permute.xlu0 %437
      %440 = vst.msk [vmem:[#allocation3 + $0x4] sm:$0xf] %vm433, %v438
      %v441 = vld [vmem:[#allocation4] sm:$0xf]
      %v442 = vshrl.u32 %v197, 16
      %v443 = vpack.i.b16 %v442, %v442
      %v445 = vlaneseq
      %v446 = vshrl.u32 %v445, 7
      %v447 = vsub.s32 0, %v446
      %v448 = vrot.slane %v443, %v447
      %v450 = vunpack.c.l.b16 %v448
      %v451 = vpack.c.b16 %v450, %v450
      %452 = vrot.lane.b32.xlu0 %v451, 2
      %v453 = vpop.permute.xlu0 %452
      %v455 = vmul.bf16 %v441, %v453
      %457 = vrot.lane.b32.xlu0 %v455, 126
      %v458 = vpop.permute.xlu0 %457
      %460 = vst.msk [vmem:[#allocation3 + $0x8] sm:$0xf] %vm433, %v458
      %v461 = vld [vmem:[#allocation4] sm:$0xf]
      %v462 = vunpack.c.l.b16 %v206
      %v463 = vpack.c.b16 %v462, %v462
      %464 = vrot.lane.b32.xlu0 %v463, 8
      %v465 = vpop.permute.xlu0 %464
      %v467 = vmul.bf16 %v461, %v465
      %469 = vrot.lane.b32.xlu0 %v467, 120
      %v470 = vpop.permute.xlu0 %469
      %472 = vst.msk [vmem:[#allocation3 + $0xc] sm:$0xf] %vm433, %v470
      %v473 = vld [vmem:[#allocation4] sm:$0xf]
      %475 = vrot.lane.b32.xlu0 %v473, 119
      %v476 = vpop.permute.xlu0 %475
      %478 = vst.msk [vmem:[#allocation3 + $0x10] sm:$0xf] %vm433, %v476
      %v479 = vld [vmem:[#allocation4] sm:$0xf]
      %480 = vrot.lane.b32.xlu0 %v451, 10
      %v481 = vpop.permute.xlu0 %480
      %v483 = vmul.bf16 %v479, %v481
      %485 = vrot.lane.b32.xlu0 %v483, 118
      %v486 = vpop.permute.xlu0 %485
      %488 = vst.msk [vmem:[#allocation3 + $0x14] sm:$0xf] %vm433, %v486
      %v489 = vld [vmem:[#allocation4] sm:$0xf]
      %490 = vrot.lane.b32.xlu0 %v463, 16
      %v491 = vpop.permute.xlu0 %490
      %v493 = vmul.bf16 %v489, %v491
      %495 = vrot.lane.b32.xlu0 %v493, 112
      %v496 = vpop.permute.xlu0 %495
      %498 = vst.msk [vmem:[#allocation3 + $0x18] sm:$0xf] %vm433, %v496
      %v499 = vld [vmem:[#allocation4] sm:$0xf]
      %501 = vrot.lane.b32.xlu0 %v499, 111
      %v502 = vpop.permute.xlu0 %501
      %504 = vst.msk [vmem:[#allocation3 + $0x1c] sm:$0xf] %vm433, %v502
      %v505 = vld [vmem:[#allocation4] sm:$0xf]
      %506 = vrot.lane.b32.xlu0 %v451, 18
      %v507 = vpop.permute.xlu0 %506
      %v509 = vmul.bf16 %v505, %v507
      %511 = vrot.lane.b32.xlu0 %v509, 110
      %v512 = vpop.permute.xlu0 %511
      %514 = vst.msk [vmem:[#allocation3 + $0x20] sm:$0xf] %vm433, %v512
      %v515 = vld [vmem:[%s3] sm:$0xf]
      %v516 = vld [vmem:[#allocation3] sm:$0xf]
      %v517 = vld [vmem:[#allocation3 + $0x4] sm:$0xf]
      %v518 = vld [vmem:[#allocation3 + $0x8] sm:$0xf]
      %v519 = vld [vmem:[#allocation3 + $0xc] sm:$0xf]
      %v520 = vld [vmem:[#allocation3 + $0x10] sm:$0xf]
      %v521 = vld [vmem:[#allocation3 + $0x14] sm:$0xf]
      %v522 = vld [vmem:[#allocation3 + $0x18] sm:$0xf]
      %v523 = vld [vmem:[#allocation3 + $0x1c] sm:$0xf]
      %v524 = vld [vmem:[#allocation3 + $0x20] sm:$0xf]
      %v534 = vunpack.c.l.b16 %v516
      %v535 = vunpack.c.l.b16 %v517
      %v536 = vunpack.c.l.b16 %v518
      %v537 = vunpack.c.l.b16 %v519
      %v538 = vunpack.c.l.b16 %v520
      %v539 = vunpack.c.l.b16 %v521
      %v540 = vunpack.c.l.b16 %v522
      %v541 = vunpack.c.l.b16 %v523
      %v542 = vunpack.c.l.b16 %v524
      %v543 = vpack.c.b16 %v535, %v534
      %v544 = vpack.c.b16 %v537, %v536
      %v545 = vpack.c.b16 %v539, %v538
      %v546 = vpack.c.b16 %v541, %v540
      %v547 = vpack.c.b16 %v542, %v542
      %vm552 = vcmask 588800
      %v554 = vsel %vm552, %v515, 0
      %vm556 = vcmask 1043456
      %v558 = vsel %vm556, %v547, 0
      %560 = vmatprep.subr.bf16.mxu0 0
      %561 = vmatpush1.bf16.msra.mxu0 %v543
      %562 = vmatprep.subr.bf16.mxu0 0
      %563 = vmatpush1.bf16.msra.mxu0 %v544
      %564 = vmatprep.subr.bf16.mxu0 0
      %565 = vmatpush1.bf16.msra.mxu0 %v545
      %566 = vmatprep.subr.bf16.mxu0 0
      %567 = vmatpush1.bf16.msra.mxu0 %v546
      %568 = vmatprep.subr.bf16.mxu0 0
      %569 = vmatpush1.bf16.msra.mxu0 %v558
      %570 = vmatprep.subr.bf16.mxu0 0
      %571 = vmatpush1.bf16.msra.mxu0 0
      %572 = vmatprep.subr.bf16.mxu0 0
      %573 = vmatpush1.bf16.msra.mxu0 0
      %574 = vmatprep.subr.bf16.mxu0 0
      %575 = vmatpush1.bf16.msra.mxu0 0
      %576 = vmatprep.subr.bf16.mxu0 0
      %577 = vmatpush1.bf16.msra.mxu0 0
      %578 = vmatprep.subr.bf16.mxu0 0
      %579 = vmatpush1.bf16.msra.mxu0 0
      %580 = vmatprep.subr.bf16.mxu0 0
      %581 = vmatpush1.bf16.msra.mxu0 0
      %582 = vmatprep.subr.bf16.mxu0 0
      %583 = vmatpush1.bf16.msra.mxu0 0
      %584 = vmatprep.subr.bf16.mxu0 0
      %585 = vmatpush1.bf16.msra.mxu0 0
      %586 = vmatprep.subr.bf16.mxu0 0
      %587 = vmatpush1.bf16.msra.mxu0 0
      %588 = vmatprep.subr.bf16.mxu0 0
      %589 = vmatpush1.bf16.msra.mxu0 0
      %590 = vmatprep.subr.bf16.mxu0 0
      %591 = vmatpush1.bf16.msra.mxu0 0
      %592 = vmatprep.mubr.bf16.mxu0 0
      %593 = vmatmul.mubr.bf16.gmra.mrb[0].mxu0 %v554
      %v594 = vpop.f32.mrb[0].mxu0
      %v595 = vadd.f32 0.0, %v594
      %v596 = vpop.f32.mrb[0].mxu0
      %v597 = vpop.f32.mrb[0].mxu0
      %v598 = vpop.f32.mrb[0].mxu0
      %599 = vdwg.mxu0
      %v600 = vsel %vm401, %v595, 0.0
      %601 = vadd.xlane.f32.xlu0 %v600
      %v602 = vpop.xlane.xlu0 %601
      %v603 = vmul.f32 %v602, 0.015625
      %v604 = vsub.f32 %v595, %v603
      %v605 = vmul.f32 %v604, %v604
      %v606 = vsel %vm401, %v605, 0.0
      %607 = vadd.xlane.f32.xlu0 %v606
      %v608 = vpop.xlane.xlu0 %607
      %v609 = vmul.f32 %v608, 0.015625
      %v610 = vadd.f32 %v609, 1e-05
      %v611 = vrsqrt.pop %v610
      %v612 = vmul.f32 %v604, %v611
      %vm613 = vcmp.ge.f32.partialorder %v612, 0.0
      %v614 = vmul.f32 %v612, 0.01
      %v615 = vsel %vm613, %v612, %v614
      %616 = vst.msk [vmem:[%s195] sm:$0xff] %vm401, %v615
      %p617 = scmp.lt.s32.totalorder %s15, 1
      %s618 = scalar_select %p617, %s15, 1
      %s619 = smul.addr %s618, 8
      %s620 = scalar_lea.vmem %s4, %s619
      // Predicated region
      $region37: #{down_forward.1} parent=35 // pred_check
        %p621 = pneg %p122
      $region38: #{down_forward.1} parent=35 // pred_check_branch
        %623 = sbr.rel (%p621) target = $region40
      $region39: #{down_forward.1} parent=35 // pred_region
        _
      $region40: #{down_forward.1} parent=35 // pred_fallthru
        _
    $region36: #{down_forward.1} parent=5 // pred_fallthru
      _
    %p624 = scmp.le.s32.totalorder 2, %s10
    // Predicated region
    $region41: #{down_forward.1} parent=5 // pred_check
      %p625 = pneg %p624
    $region42: #{down_forward.1} parent=5 // pred_check_branch
      %627 = sbr.rel (%p625) target = $region44
    $region43: #{down_forward.1} parent=5 // pred_region
      %s628 = ssub.s32 %s10, 2
      // Predicated region
      $region45: #{down_forward.1} parent=43 // pred_check
        %p629 = pneg %p128
      $region46: #{down_forward.1} parent=43 // pred_check_branch
        %631 = sbr.rel (%p629) target = $region48
      $region47: #{down_forward.1} parent=43 // pred_region
        %p632 = scmp.lt.s32.totalorder %s16, 1
        %s633 = scalar_select %p632, %s16, 1
        %s634 = smul.addr %s633, 8
        %s635 = scalar_lea.vmem %s4, %s634
      $region48: #{down_forward.1} parent=43 // pred_fallthru
        _
    $region44: #{down_forward.1} parent=5 // pred_fallthru
      _
  $region6: #{down_forward.1} parent=0 // loop_footer
    %s14 = sadd.s32 1, %s10
  $region7: #{down_forward.1} parent=0 // loop_footer_branch
    %9 = sbr.rel target = $region3
  $region8: #{down_forward.1} parent=0 // loop_exit
    _

</llo_original>
